<compile_context>
chip_gen: v5e
topology: v5e:2x2
jax: 0.10.0
libtpu: 0.0.40
codegen_flags: <defaults>
</compile_context>

<pallas_src>
import functools

import jax
import jax.numpy as jnp
from jax import lax
from jax.experimental import pallas as pl
from jax.experimental.pallas import tpu as pltpu


# ----------------------------------------------------------------------------
# Fused kernel: stride-2 gated conv + stride-1 gated conv (one image per step)
# ----------------------------------------------------------------------------
def _gdown_block_kernel(s2d_ref, w1_ref, b1_ref, w2_ref, b2_ref,
                        out_ref, y1pad_ref):
    # s2d_ref:   (1, Hm+1, Wm+1, 4*Cin)  space-to-depth of zero-padded input
    # w1_ref:    (16*Cin, 2*Chid)        folded conv1 weight (stride-2 conv)
    # b1_ref:    (1, 2*Chid)
    # w2_ref:    (9*Chid, 2*Cout)        folded conv2 weight (stride-1 conv)
    # b2_ref:    (1, 2*Cout)
    # out_ref:   (1, Hm, Wm, Cout)
    # y1pad_ref: (Hm+2, Wm+2, Chid)      VMEM scratch: padded conv1 activation
    _, Hm, Wm, cout = out_ref.shape
    chid = y1pad_ref.shape[-1]

    def gated(acc, c):
        feat = acc[:, :c]
        gate = acc[:, c:]
        # ELU(alpha=1) * sigmoid(gate); clamp exp arg for the untaken branch.
        feat = jnp.where(feat > 0, feat, jnp.exp(jnp.minimum(feat, 0.0)) - 1.0)
        return feat * jax.nn.sigmoid(gate)

    # ---- conv1_downsample: 3x3/stride-2 gated conv == 2x2/stride-1 conv on the
    #      space-to-depth input; one im2col matmul with K = 16*Cin.
    s = s2d_ref[0]                                          # (Hm+1, Wm+1, 4*Cin)
    p1 = jnp.concatenate(
        [s[0:Hm, 0:Wm, :], s[0:Hm, 1:Wm + 1, :],
         s[1:Hm + 1, 0:Wm, :], s[1:Hm + 1, 1:Wm + 1, :]],
        axis=-1).reshape(Hm * Wm, -1)                       # (Hm*Wm, 16*Cin)
    acc1 = jnp.dot(p1, w1_ref[...],
                   preferred_element_type=jnp.float32) + b1_ref[...]
    y1 = gated(acc1, chid)                                  # (Hm*Wm, Chid)

    # Fused intermediate: conv1 output stays in VMEM, zero-padded for pad=1.
    y1pad_ref[...] = jnp.zeros_like(y1pad_ref)
    y1pad_ref[1:Hm + 1, 1:Wm + 1, :] = y1.reshape(Hm, Wm, chid)

    # ---- conv2: 3x3/stride-1 gated conv; one im2col matmul with K = 9*Chid.
    yp = y1pad_ref[...]                                     # (Hm+2, Wm+2, Chid)
    p2 = jnp.concatenate(
        [yp[kh:kh + Hm, kw:kw + Wm, :] for kh in range(3) for kw in range(3)],
        axis=-1).reshape(Hm * Wm, -1)                       # (Hm*Wm, 9*Chid)
    acc2 = jnp.dot(p2, w2_ref[...],
                   preferred_element_type=jnp.float32) + b2_ref[...]
    y2 = gated(acc2, cout)                                  # (Hm*Wm, Cout)

    out_ref[...] = y2.reshape(1, Hm, Wm, cout).astype(out_ref.dtype)


# ----------------------------------------------------------------------------
# Wrapper: layout glue + weight folding + pallas_call
# ----------------------------------------------------------------------------
def _fold_conv1_weight(w1):
    """(3,3,Cin,2*Chid) HWIO -> (16*Cin, 2*Chid) matching the s2d im2col order."""
    cin, c2 = w1.shape[2], w1.shape[3]
    w1p = jnp.pad(w1, ((0, 1), (0, 1), (0, 0), (0, 0)))     # (4,4,Cin,2*Chid)
    w1r = w1p.reshape(2, 2, 2, 2, cin, c2)                  # [qh,dy,qw,dx,c,o]
    w1r = jnp.transpose(w1r, (0, 2, 1, 3, 4, 5))            # [qh,qw,dy,dx,c,o]
    return w1r.reshape(16 * cin, c2)


def g_downsampling_block(x_nchw, params):
    """x_nchw: (N, Cin, H, W) float32 -> (N, Cout, H//2, W//2). H, W even."""
    (w1, b1), (w2, b2) = params
    N, Cin, H, W = x_nchw.shape
    assert H % 2 == 0 and W % 2 == 0, "even spatial dims required"
    chid = w1.shape[-1] // 2
    cout = w2.shape[-1] // 2
    Hm, Wm = H // 2, W // 2

    # Glue on tiny tensors: NCHW->NHWC, 1-px pad, space-to-depth (2x2->channels).
    x = jnp.transpose(x_nchw, (0, 2, 3, 1))
    xp = jnp.pad(x, ((0, 0), (1, 1), (1, 1), (0, 0)))       # (N, H+2, W+2, Cin)
    s2d = xp.reshape(N, Hm + 1, 2, Wm + 1, 2, Cin)
    s2d = jnp.transpose(s2d, (0, 1, 3, 2, 4, 5)).reshape(N, Hm + 1, Wm + 1, 4 * Cin)

    w1f = _fold_conv1_weight(w1)                            # (16*Cin, 2*chid)
    w2f = w2.reshape(9 * chid, 2 * cout)                    # (9*chid, 2*cout)
    b1f = b1.reshape(1, 2 * chid)
    b2f = b2.reshape(1, 2 * cout)

    out_nhwc = pl.pallas_call(
        _gdown_block_kernel,
        out_shape=jax.ShapeDtypeStruct((N, Hm, Wm, cout), x_nchw.dtype),
        grid=(N,),
        in_specs=[
            pl.BlockSpec((1, Hm + 1, Wm + 1, 4 * Cin), lambda n: (n, 0, 0, 0)),
            pl.BlockSpec((16 * Cin, 2 * chid), lambda n: (0, 0)),
            pl.BlockSpec((1, 2 * chid), lambda n: (0, 0)),
            pl.BlockSpec((9 * chid, 2 * cout), lambda n: (0, 0)),
            pl.BlockSpec((1, 2 * cout), lambda n: (0, 0)),
        ],
        out_specs=pl.BlockSpec((1, Hm, Wm, cout), lambda n: (n, 0, 0, 0)),
        scratch_shapes=[pltpu.VMEM((Hm + 2, Wm + 2, chid), jnp.float32)],
        compiler_params=pltpu.CompilerParams(
            dimension_semantics=("parallel",)),
    )(s2d, w1f, b1f, w2f, b2f)

    # NHWC -> NCHW (PyTorch convention); tiny (N,8,8,8) tensor, pure glue.
    return jnp.transpose(out_nhwc, (0, 3, 1, 2))


# ----------------------------------------------------------------------------
# Parameter init (deterministic; mimics kaiming_uniform fan_out / relu gain)
# ----------------------------------------------------------------------------
def init_gconv_params(key, cnum_in, cnum_out):
    """HWIO weight (3,3,Cin,2*Cout), zero bias (2*Cout,)."""
    c2 = 2 * cnum_out
    fan_out = c2 * 3 * 3
    bound = (6.0 / fan_out) ** 0.5
    w = jax.random.uniform(key, (3, 3, cnum_in, c2), jnp.float32,
                           minval=-bound, maxval=bound)
    return w, jnp.zeros((c2,), jnp.float32)


# ----------------------------------------------------------------------------
# Pure-JAX reference (for correctness check)
# ----------------------------------------------------------------------------
def _ref_gconv(x_nhwc, w, b, stride):
    c = w.shape[-1] // 2
    y = lax.conv_general_dilated(
        x_nhwc, w, window_strides=(stride, stride), padding=((1, 1), (1, 1)),
        dimension_numbers=("NHWC", "HWIO", "NHWC"),
        precision=lax.Precision.HIGHEST)
    y = y + b.reshape(1, 1, 1, -1)
    f, g = y[..., :c], y[..., c:]
    return jnp.where(f > 0, f, jnp.expm1(f)) * jax.nn.sigmoid(g)


def _ref_block(x_nchw, params):
    (w1, b1), (w2, b2) = params
    x = jnp.transpose(x_nchw, (0, 2, 3, 1))
    x = _ref_gconv(x, w1, b1, 2)
    x = _ref_gconv(x, w2, b2, 1)
    return jnp.transpose(x, (0, 3, 1, 2))


if __name__ == "__main__":
    key = jax.random.PRNGKey(0)
    k_x, k_w1, k_w2 = jax.random.split(key, 3)

    N, cnum_in, H, W = 2, 4, 16, 16
    cnum_out = 8
    cnum_hidden = cnum_out          # GDownsamplingBlock default (cnum_hidden=None)

    x = jax.random.normal(k_x, (N, cnum_in, H, W), jnp.float32)
    params = (
        init_gconv_params(k_w1, cnum_in, cnum_hidden),   # conv1_downsample
        init_gconv_params(k_w2, cnum_hidden, cnum_out),  # conv2
    )

    fwd = jax.jit(functools.partial(g_downsampling_block, params=params))
    out = jax.block_until_ready(fwd(x))

    ref = _ref_block(x, params)
    assert out.shape == (N, cnum_out, H // 2, W // 2), out.shape
    max_err = float(jnp.max(jnp.abs(out - ref)))
    assert jnp.allclose(out, ref, atol=1e-3, rtol=1e-3), max_err
    print("KERNEL_OK")
</pallas_src>

<mosaic_0001>
module attributes {stable_mosaic.version = 11 : i64} {
  func.func @_gdown_block_kernel(%arg0: i32, %arg1: memref<1x9x9x16xf32, #tpu.memory_space<vmem>>, %arg2: memref<64x16xf32, #tpu.memory_space<vmem>>, %arg3: memref<1x16xf32, #tpu.memory_space<vmem>>, %arg4: memref<72x16xf32, #tpu.memory_space<vmem>>, %arg5: memref<1x16xf32, #tpu.memory_space<vmem>>, %arg6: memref<1x8x8x8xf32, #tpu.memory_space<vmem>>, %arg7: memref<10x10x8xf32, #tpu.memory_space<vmem>>) attributes {dimension_semantics = [#tpu.dimension_semantics<parallel>], iteration_bounds = array<i64: 2>, scalar_prefetch = 0 : i64, scratch_operands = 1 : i64, tpu.core_type = #tpu.core_type<tc>, window_params = [{transform_indices = @transform_0, window_bounds = array<i64: 1, 9, 9, 16>}, {pipeline_mode = #tpu.pipeline_mode<synchronous>, transform_indices = @transform_1, window_bounds = array<i64: 64, 16>}, {pipeline_mode = #tpu.pipeline_mode<synchronous>, transform_indices = @transform_2, window_bounds = array<i64: 1, 16>}, {pipeline_mode = #tpu.pipeline_mode<synchronous>, transform_indices = @transform_3, window_bounds = array<i64: 72, 16>}, {pipeline_mode = #tpu.pipeline_mode<synchronous>, transform_indices = @transform_4, window_bounds = array<i64: 1, 16>}, {transform_indices = @transform_5, window_bounds = array<i64: 1, 8, 8, 8>}]} {
    %c0 = arith.constant 0 : index
    %c0_0 = arith.constant 0 : index
    %c0_1 = arith.constant 0 : index
    %c0_2 = arith.constant 0 : index
    %0 = vector.load %arg1[%c0, %c0_0, %c0_1, %c0_2] : memref<1x9x9x16xf32, #tpu.memory_space<vmem>>, vector<1x9x9x16xf32>
    %1 = vector.shape_cast %0 : vector<1x9x9x16xf32> to vector<9x9x16xf32>
    %2 = vector.extract_strided_slice %1 {offsets = [0, 0, 0], sizes = [8, 8, 16], strides = [1, 1, 1]} : vector<9x9x16xf32> to vector<8x8x16xf32>
    %3 = vector.extract_strided_slice %1 {offsets = [0, 1, 0], sizes = [8, 8, 16], strides = [1, 1, 1]} : vector<9x9x16xf32> to vector<8x8x16xf32>
    %4 = vector.extract_strided_slice %1 {offsets = [1, 0, 0], sizes = [8, 8, 16], strides = [1, 1, 1]} : vector<9x9x16xf32> to vector<8x8x16xf32>
    %5 = vector.extract_strided_slice %1 {offsets = [1, 1, 0], sizes = [8, 8, 16], strides = [1, 1, 1]} : vector<9x9x16xf32> to vector<8x8x16xf32>
    %6 = tpu.concatenate %2, %3, %4, %5 in 2 : vector<8x8x16xf32>, vector<8x8x16xf32>, vector<8x8x16xf32>, vector<8x8x16xf32> -> vector<8x8x64xf32>
    %7 = vector.shape_cast %6 : vector<8x8x64xf32> to vector<64x64xf32>
    %c0_3 = arith.constant 0 : index
    %c0_4 = arith.constant 0 : index
    %8 = vector.load %arg2[%c0_3, %c0_4] : memref<64x16xf32, #tpu.memory_space<vmem>>, vector<64x16xf32>
    %cst = arith.constant dense<0.000000e+00> : vector<64x16xf32>
    %9 = tpu.matmul %7, %8, %cst {dimension_numbers = #tpu.dot_dimension_numbers<[1], [0], [0], [1], [0, 0, 1, 1], [], []>} : vector<64x64xf32>, vector<64x16xf32>, vector<64x16xf32> -> vector<64x16xf32>
    %c0_5 = arith.constant 0 : index
    %c0_6 = arith.constant 0 : index
    %10 = vector.load %arg3[%c0_5, %c0_6] : memref<1x16xf32, #tpu.memory_space<vmem>>, vector<1x16xf32>
    %11 = vector.broadcast %10 : vector<1x16xf32> to vector<64x16xf32>
    %12 = arith.addf %9, %11 : vector<64x16xf32>
    %13 = vector.extract_strided_slice %12 {offsets = [0, 0], sizes = [64, 8], strides = [1, 1]} : vector<64x16xf32> to vector<64x8xf32>
    %14 = vector.extract_strided_slice %12 {offsets = [0, 8], sizes = [64, 8], strides = [1, 1]} : vector<64x16xf32> to vector<64x8xf32>
    %cst_7 = arith.constant 0.000000e+00 : f32
    %15 = vector.broadcast %cst_7 : f32 to vector<64x8xf32>
    %16 = arith.cmpf ogt, %13, %15 : vector<64x8xf32>
    %cst_8 = arith.constant 0.000000e+00 : f32
    %17 = vector.broadcast %cst_8 : f32 to vector<64x8xf32>
    %18 = arith.minimumf %13, %17 : vector<64x8xf32>
    %19 = math.exp %18 : vector<64x8xf32>
    %cst_9 = arith.constant 1.000000e+00 : f32
    %20 = vector.broadcast %cst_9 : f32 to vector<64x8xf32>
    %21 = arith.subf %19, %20 : vector<64x8xf32>
    %22 = arith.select %16, %13, %21 : vector<64x8xi1>, vector<64x8xf32>
    %23 = arith.negf %14 : vector<64x8xf32>
    %24 = math.exp %23 : vector<64x8xf32>
    %cst_10 = arith.constant 1.000000e+00 : f32
    %25 = vector.broadcast %cst_10 : f32 to vector<64x8xf32>
    %26 = arith.addf %25, %24 : vector<64x8xf32>
    %27 = arith.divf %25, %26 : vector<64x8xf32>
    %28 = arith.mulf %22, %27 : vector<64x8xf32>
    %cst_11 = arith.constant 0.000000e+00 : f32
    %29 = vector.broadcast %cst_11 : f32 to vector<10x10x8xf32>
    %c0_12 = arith.constant 0 : index
    %c0_13 = arith.constant 0 : index
    %c0_14 = arith.constant 0 : index
    %30 = vector.load %arg7[%c0_12, %c0_13, %c0_14] : memref<10x10x8xf32, #tpu.memory_space<vmem>>, vector<10x10x8xf32>
    tpu.vector_store %arg7[%c0_12, %c0_13, %c0_14], %29 {strides = array<i32>} : memref<10x10x8xf32, #tpu.memory_space<vmem>>, vector<10x10x8xf32>,
    %31 = vector.shape_cast %28 : vector<64x8xf32> to vector<8x8x8xf32>
    %c1 = arith.constant 1 : index
    %c1_15 = arith.constant 1 : index
    %c0_16 = arith.constant 0 : index
    %32 = vector.load %arg7[%c1, %c1_15, %c0_16] : memref<10x10x8xf32, #tpu.memory_space<vmem>>, vector<8x8x8xf32>
    tpu.vector_store %arg7[%c1, %c1_15, %c0_16], %31 {strides = array<i32>} : memref<10x10x8xf32, #tpu.memory_space<vmem>>, vector<8x8x8xf32>,
    %c0_17 = arith.constant 0 : index
    %c0_18 = arith.constant 0 : index
    %c0_19 = arith.constant 0 : index
    %33 = vector.load %arg7[%c0_17, %c0_18, %c0_19] : memref<10x10x8xf32, #tpu.memory_space<vmem>>, vector<10x10x8xf32>
    %34 = vector.extract_strided_slice %33 {offsets = [0, 0, 0], sizes = [8, 8, 8], strides = [1, 1, 1]} : vector<10x10x8xf32> to vector<8x8x8xf32>
    %35 = vector.extract_strided_slice %33 {offsets = [0, 1, 0], sizes = [8, 8, 8], strides = [1, 1, 1]} : vector<10x10x8xf32> to vector<8x8x8xf32>
    %36 = vector.extract_strided_slice %33 {offsets = [0, 2, 0], sizes = [8, 8, 8], strides = [1, 1, 1]} : vector<10x10x8xf32> to vector<8x8x8xf32>
    %37 = vector.extract_strided_slice %33 {offsets = [1, 0, 0], sizes = [8, 8, 8], strides = [1, 1, 1]} : vector<10x10x8xf32> to vector<8x8x8xf32>
    %38 = vector.extract_strided_slice %33 {offsets = [1, 1, 0], sizes = [8, 8, 8], strides = [1, 1, 1]} : vector<10x10x8xf32> to vector<8x8x8xf32>
    %39 = vector.extract_strided_slice %33 {offsets = [1, 2, 0], sizes = [8, 8, 8], strides = [1, 1, 1]} : vector<10x10x8xf32> to vector<8x8x8xf32>
    %40 = vector.extract_strided_slice %33 {offsets = [2, 0, 0], sizes = [8, 8, 8], strides = [1, 1, 1]} : vector<10x10x8xf32> to vector<8x8x8xf32>
    %41 = vector.extract_strided_slice %33 {offsets = [2, 1, 0], sizes = [8, 8, 8], strides = [1, 1, 1]} : vector<10x10x8xf32> to vector<8x8x8xf32>
    %42 = vector.extract_strided_slice %33 {offsets = [2, 2, 0], sizes = [8, 8, 8], strides = [1, 1, 1]} : vector<10x10x8xf32> to vector<8x8x8xf32>
    %43 = tpu.concatenate %34, %35, %36, %37, %38, %39, %40, %41, %42 in 2 : vector<8x8x8xf32>, vector<8x8x8xf32>, vector<8x8x8xf32>, vector<8x8x8xf32>, vector<8x8x8xf32>, vector<8x8x8xf32>, vector<8x8x8xf32>, vector<8x8x8xf32>, vector<8x8x8xf32> -> vector<8x8x72xf32>
    %44 = vector.shape_cast %43 : vector<8x8x72xf32> to vector<64x72xf32>
    %c0_20 = arith.constant 0 : index
    %c0_21 = arith.constant 0 : index
    %45 = vector.load %arg4[%c0_20, %c0_21] : memref<72x16xf32, #tpu.memory_space<vmem>>, vector<72x16xf32>
    %cst_22 = arith.constant dense<0.000000e+00> : vector<64x16xf32>
    %46 = tpu.matmul %44, %45, %cst_22 {dimension_numbers = #tpu.dot_dimension_numbers<[1], [0], [0], [1], [0, 0, 1, 1], [], []>} : vector<64x72xf32>, vector<72x16xf32>, vector<64x16xf32> -> vector<64x16xf32>
    %c0_23 = arith.constant 0 : index
    %c0_24 = arith.constant 0 : index
    %47 = vector.load %arg5[%c0_23, %c0_24] : memref<1x16xf32, #tpu.memory_space<vmem>>, vector<1x16xf32>
    %48 = vector.broadcast %47 : vector<1x16xf32> to vector<64x16xf32>
    %49 = arith.addf %46, %48 : vector<64x16xf32>
    %50 = vector.extract_strided_slice %49 {offsets = [0, 0], sizes = [64, 8], strides = [1, 1]} : vector<64x16xf32> to vector<64x8xf32>
    %51 = vector.extract_strided_slice %49 {offsets = [0, 8], sizes = [64, 8], strides = [1, 1]} : vector<64x16xf32> to vector<64x8xf32>
    %cst_25 = arith.constant 0.000000e+00 : f32
    %52 = vector.broadcast %cst_25 : f32 to vector<64x8xf32>
    %53 = arith.cmpf ogt, %50, %52 : vector<64x8xf32>
    %cst_26 = arith.constant 0.000000e+00 : f32
    %54 = vector.broadcast %cst_26 : f32 to vector<64x8xf32>
    %55 = arith.minimumf %50, %54 : vector<64x8xf32>
    %56 = math.exp %55 : vector<64x8xf32>
    %cst_27 = arith.constant 1.000000e+00 : f32
    %57 = vector.broadcast %cst_27 : f32 to vector<64x8xf32>
    %58 = arith.subf %56, %57 : vector<64x8xf32>
    %59 = arith.select %53, %50, %58 : vector<64x8xi1>, vector<64x8xf32>
    %60 = arith.negf %51 : vector<64x8xf32>
    %61 = math.exp %60 : vector<64x8xf32>
    %cst_28 = arith.constant 1.000000e+00 : f32
    %62 = vector.broadcast %cst_28 : f32 to vector<64x8xf32>
    %63 = arith.addf %62, %61 : vector<64x8xf32>
    %64 = arith.divf %62, %63 : vector<64x8xf32>
    %65 = arith.mulf %59, %64 : vector<64x8xf32>
    %66 = vector.shape_cast %65 : vector<64x8xf32> to vector<1x8x8x8xf32>
    %c0_29 = arith.constant 0 : index
    %c0_30 = arith.constant 0 : index
    %c0_31 = arith.constant 0 : index
    %c0_32 = arith.constant 0 : index
    %67 = vector.load %arg6[%c0_29, %c0_30, %c0_31, %c0_32] : memref<1x8x8x8xf32, #tpu.memory_space<vmem>>, vector<1x8x8x8xf32>
    tpu.vector_store %arg6[%c0_29, %c0_30, %c0_31, %c0_32], %66 {strides = array<i32>} : memref<1x8x8x8xf32, #tpu.memory_space<vmem>>, vector<1x8x8x8xf32>,
    return
  }
  func.func @transform_0(%arg0: i32) -> (i32, i32, i32, i32) {
    %c0_i32 = arith.constant 0 : i32
    %c0_i32_0 = arith.constant 0 : i32
    %c0_i32_1 = arith.constant 0 : i32
    %c0_i32_2 = arith.constant 0 : i32
    return %arg0, %c0_i32, %c0_i32_0, %c0_i32_1 : i32, i32, i32, i32
  }
  func.func @transform_1(%arg0: i32) -> (i32, i32) {
    %c0_i32 = arith.constant 0 : i32
    %c0_i32_0 = arith.constant 0 : i32
    %c0_i32_1 = arith.constant 0 : i32
    return %c0_i32, %c0_i32_0 : i32, i32
  }
  func.func @transform_2(%arg0: i32) -> (i32, i32) {
    %c0_i32 = arith.constant 0 : i32
    %c0_i32_0 = arith.constant 0 : i32
    %c0_i32_1 = arith.constant 0 : i32
    return %c0_i32, %c0_i32_0 : i32, i32
  }
  func.func @transform_3(%arg0: i32) -> (i32, i32) {
    %c0_i32 = arith.constant 0 : i32
    %c0_i32_0 = arith.constant 0 : i32
    %c0_i32_1 = arith.constant 0 : i32
    return %c0_i32, %c0_i32_0 : i32, i32
  }
  func.func @transform_4(%arg0: i32) -> (i32, i32) {
    %c0_i32 = arith.constant 0 : i32
    %c0_i32_0 = arith.constant 0 : i32
    %c0_i32_1 = arith.constant 0 : i32
    return %c0_i32, %c0_i32_0 : i32, i32
  }
  func.func @transform_5(%arg0: i32) -> (i32, i32, i32, i32) {
    %c0_i32 = arith.constant 0 : i32
    %c0_i32_0 = arith.constant 0 : i32
    %c0_i32_1 = arith.constant 0 : i32
    %c0_i32_2 = arith.constant 0 : i32
    return %arg0, %c0_i32, %c0_i32_0, %c0_i32_1 : i32, i32, i32, i32
  }
}

</mosaic_0001>

<llo_original>
// kernel: g_downsampling_block.1
$region0: #{g_downsampling_block.1}
  #allocation0 [shape = 'u32[]', space=smem, size = 0x4, offset = 0x4, fixed_abs, tag = 'smem constant byte address 0x4 - core index']
  #allocation1 [shape = 'u32[72,128]{1,0:T(1,128)}', space=vmem, size = 0x9000, scoped, tag = 'internal scratch']
  #allocation2 [shape = 'f32[10,10,8]{2,1,0:T(8,128)}', space=vmem, size = 0x14000, scoped, tag = 'scratch operand']
  %s0 = inlined_call_operand.vmem [shape: f32[2,9,9,16], index: 0, kind: input, shape index: {}]
  %s1 = inlined_call_operand.vmem [shape: f32[64,16], index: 1, kind: input, shape index: {}]
  %s2 = inlined_call_operand.vmem [shape: f32[1,16], index: 2, kind: input, shape index: {}, may-alias: {2,4}]
  %s3 = inlined_call_operand.vmem [shape: f32[72,16], index: 3, kind: input, shape index: {}]
  %s4 = inlined_call_operand.vmem [shape: f32[1,16], index: 4, kind: input, shape index: {}, may-alias: {2,4}]
  %s5 = inlined_call_operand.vmem [shape: f32[2,8,8,8], index: 5, kind: output, shape index: {}]
  %s6 = sld [smem:[#allocation0]]
  $region53: #{g_downsampling_block.1} parent=0
    _
  %s8 = ssub.s32 1, %s6
  %s9 = scalar_select 0, %s8, %s6
  loop: start=0, step=1, limit=4
  $region2: #{g_downsampling_block.1} parent=0 // loop_pre_header
    _
  $region3: #{g_downsampling_block.1} parent=0 // loop_header
    %s11 = sphi 0, %s15
    %p12 = scmp.ge.s32.totalorder %s11, 4
    %s21 = sphi 0, %s23
    %s24 = sphi 0, %s21
    %s25 = sphi 0, %s24
    %s41 = sphi 0, %s25
    %s45 = sphi 0, %s45
    %s47 = sphi 0, %s45
    %s48 = sphi 0, %s47
    %s62 = sphi 0, %s48
    %s66 = sphi 0, %s66
    %s68 = sphi 0, %s66
    %s69 = sphi 0, %s68
    %s83 = sphi 0, %s69
    %s87 = sphi 0, %s87
    %s89 = sphi 0, %s87
    %s90 = sphi 0, %s89
    %s104 = sphi 0, %s90
    %s108 = sphi 0, %s108
    %s110 = sphi 0, %s108
    %s111 = sphi 0, %s110
    %s125 = sphi 0, %s111
    %s131 = sphi 0, %s133
    %s134 = sphi 0, %s131
    %s135 = sphi 0, %s134
    %s151 = sphi 0, %s135
  $region4: #{g_downsampling_block.1} parent=0 // loop_header_branch
    %14 = sbr.rel (%p12) target = $region8
  $region5: #{g_downsampling_block.1} parent=0 // loop_body
    %s16 = ssub.s32 %s11, 1
    %s17 = ssub.s32 %s11, 2
    %s18 = sadd.s32 %s11, 1
    %s19 = ssub.s32 %s11, %s18
    %p20 = scmp.eq.s32.totalorder %s19, 0
    %s22 = sadd.s32 %s21, 1
    %s23 = scalar_select %p20, %s21, %s22
    %p26 = pneg %p20
    %p27 = scmp.eq.s32.totalorder %s11, 1
    %p28 = por %p26, %p27
    %p29 = scmp.ne.s32.totalorder %s21, %s24
    %p30 = scmp.eq.s32.totalorder %s11, 0
    %p31 = por %p29, %p30
    %p32 = scmp.ne.s32.totalorder %s21, %s24
    %p33 = scmp.eq.s32.totalorder %s16, 1
    %p34 = por %p32, %p33
    %p35 = scmp.ne.s32.totalorder %s24, %s25
    %p36 = scmp.eq.s32.totalorder %s16, 0
    %p37 = por %p35, %p36
    %p38 = scmp.ne.s32.totalorder %s24, %s25
    %p39 = scmp.eq.s32.totalorder %s17, 1
    %p40 = por %p38, %p39
    %p42 = scmp.ne.s32.totalorder %s25, %s41
    %p43 = scmp.eq.s32.totalorder %s17, 0
    %p44 = por %p42, %p43
    %s46 = sadd.s32 %s45, 1
    %p49 = scmp.eq.s32.totalorder %s11, 1
    %p50 = scmp.ne.s32.totalorder %s45, %s47
    %p51 = scmp.eq.s32.totalorder %s11, 0
    %p52 = por %p50, %p51
    %p53 = scmp.ne.s32.totalorder %s45, %s47
    %p54 = scmp.eq.s32.totalorder %s16, 1
    %p55 = por %p53, %p54
    %p56 = scmp.ne.s32.totalorder %s47, %s48
    %p57 = scmp.eq.s32.totalorder %s16, 0
    %p58 = por %p56, %p57
    %p59 = scmp.ne.s32.totalorder %s47, %s48
    %p60 = scmp.eq.s32.totalorder %s17, 1
    %p61 = por %p59, %p60
    %p63 = scmp.ne.s32.totalorder %s48, %s62
    %p64 = scmp.eq.s32.totalorder %s17, 0
    %p65 = por %p63, %p64
    %s67 = sadd.s32 %s66, 1
    %p70 = scmp.eq.s32.totalorder %s11, 1
    %p71 = scmp.ne.s32.totalorder %s66, %s68
    %p72 = scmp.eq.s32.totalorder %s11, 0
    %p73 = por %p71, %p72
    %p74 = scmp.ne.s32.totalorder %s66, %s68
    %p75 = scmp.eq.s32.totalorder %s16, 1
    %p76 = por %p74, %p75
    %p77 = scmp.ne.s32.totalorder %s68, %s69
    %p78 = scmp.eq.s32.totalorder %s16, 0
    %p79 = por %p77, %p78
    %p80 = scmp.ne.s32.totalorder %s68, %s69
    %p81 = scmp.eq.s32.totalorder %s17, 1
    %p82 = por %p80, %p81
    %p84 = scmp.ne.s32.totalorder %s69, %s83
    %p85 = scmp.eq.s32.totalorder %s17, 0
    %p86 = por %p84, %p85
    %s88 = sadd.s32 %s87, 1
    %p91 = scmp.eq.s32.totalorder %s11, 1
    %p92 = scmp.ne.s32.totalorder %s87, %s89
    %p93 = scmp.eq.s32.totalorder %s11, 0
    %p94 = por %p92, %p93
    %p95 = scmp.ne.s32.totalorder %s87, %s89
    %p96 = scmp.eq.s32.totalorder %s16, 1
    %p97 = por %p95, %p96
    %p98 = scmp.ne.s32.totalorder %s89, %s90
    %p99 = scmp.eq.s32.totalorder %s16, 0
    %p100 = por %p98, %p99
    %p101 = scmp.ne.s32.totalorder %s89, %s90
    %p102 = scmp.eq.s32.totalorder %s17, 1
    %p103 = por %p101, %p102
    %p105 = scmp.ne.s32.totalorder %s90, %s104
    %p106 = scmp.eq.s32.totalorder %s17, 0
    %p107 = por %p105, %p106
    %s109 = sadd.s32 %s108, 1
    %p112 = scmp.eq.s32.totalorder %s11, 1
    %p113 = scmp.ne.s32.totalorder %s108, %s110
    %p114 = scmp.eq.s32.totalorder %s11, 0
    %p115 = por %p113, %p114
    %p116 = scmp.ne.s32.totalorder %s108, %s110
    %p117 = scmp.eq.s32.totalorder %s16, 1
    %p118 = por %p116, %p117
    %p119 = scmp.ne.s32.totalorder %s110, %s111
    %p120 = scmp.eq.s32.totalorder %s16, 0
    %p121 = por %p119, %p120
    %p122 = scmp.ne.s32.totalorder %s110, %s111
    %p123 = scmp.eq.s32.totalorder %s17, 1
    %p124 = por %p122, %p123
    %p126 = scmp.ne.s32.totalorder %s111, %s125
    %p127 = scmp.eq.s32.totalorder %s17, 0
    %p128 = por %p126, %p127
    %s129 = ssub.s32 %s11, %s18
    %p130 = scmp.eq.s32.totalorder %s129, 0
    %s132 = sadd.s32 %s131, 1
    %s133 = scalar_select %p130, %s131, %s132
    %p136 = pneg %p130
    %p137 = scmp.eq.s32.totalorder %s11, 1
    %p138 = por %p136, %p137
    %p139 = scmp.ne.s32.totalorder %s131, %s134
    %p140 = scmp.eq.s32.totalorder %s11, 0
    %p141 = por %p139, %p140
    %p142 = scmp.ne.s32.totalorder %s131, %s134
    %p143 = scmp.eq.s32.totalorder %s16, 1
    %p144 = por %p142, %p143
    %p145 = scmp.ne.s32.totalorder %s134, %s135
    %p146 = scmp.eq.s32.totalorder %s16, 0
    %p147 = por %p145, %p146
    %p148 = scmp.ne.s32.totalorder %s134, %s135
    %p149 = scmp.eq.s32.totalorder %s17, 1
    %p150 = por %p148, %p149
    %p152 = scmp.ne.s32.totalorder %s135, %s151
    %p153 = scmp.eq.s32.totalorder %s17, 0
    %p154 = por %p152, %p153
    %p155 = scmp.le.s32.totalorder 1, %s11
    %p156 = scmp.lt.s32.totalorder %s11, 3
    %p157 = pnand %p155, %p156
    %p158 = pneg %p157
    // Predicated region
    $region9: #{g_downsampling_block.1} parent=5 // pred_check
      _
    $region10: #{g_downsampling_block.1} parent=5 // pred_check_branch
      %160 = sbr.rel (%p157) target = $region12
    $region11: #{g_downsampling_block.1} parent=5 // pred_region
      %s161 = ssub.s32 %s11, 1
      // Predicated region
      $region13: #{g_downsampling_block.1} parent=11 // pred_check
        %p162 = pneg %p58
      $region14: #{g_downsampling_block.1} parent=11 // pred_check_branch
        %164 = sbr.rel (%p162) target = $region16
      $region15: #{g_downsampling_block.1} parent=11 // pred_region
        _
      $region16: #{g_downsampling_block.1} parent=11 // pred_fallthru
        _
      // Predicated region
      $region17: #{g_downsampling_block.1} parent=11 // pred_check
        %p165 = pneg %p79
      $region18: #{g_downsampling_block.1} parent=11 // pred_check_branch
        %167 = sbr.rel (%p165) target = $region20
      $region19: #{g_downsampling_block.1} parent=11 // pred_region
        _
      $region20: #{g_downsampling_block.1} parent=11 // pred_fallthru
        _
      // Predicated region
      $region21: #{g_downsampling_block.1} parent=11 // pred_check
        %p168 = pneg %p100
      $region22: #{g_downsampling_block.1} parent=11 // pred_check_branch
        %170 = sbr.rel (%p168) target = $region24
      $region23: #{g_downsampling_block.1} parent=11 // pred_region
        _
      $region24: #{g_downsampling_block.1} parent=11 // pred_fallthru
        _
      // Predicated region
      $region25: #{g_downsampling_block.1} parent=11 // pred_check
        %p171 = pneg %p121
      $region26: #{g_downsampling_block.1} parent=11 // pred_check_branch
        %173 = sbr.rel (%p171) target = $region28
      $region27: #{g_downsampling_block.1} parent=11 // pred_region
        _
      $region28: #{g_downsampling_block.1} parent=11 // pred_fallthru
        _
    $region12: #{g_downsampling_block.1} parent=5 // pred_fallthru
      _
    %p174 = scmp.lt.s32.totalorder %s11, 2
    // Predicated region
    $region29: #{g_downsampling_block.1} parent=5 // pred_check
      %p175 = pneg %p174
    $region30: #{g_downsampling_block.1} parent=5 // pred_check_branch
      %177 = sbr.rel (%p175) target = $region32
    $region31: #{g_downsampling_block.1} parent=5 // pred_region
      // Predicated region
      $region33: #{g_downsampling_block.1} parent=31 // pred_check
        %p178 = pneg %p31
      $region34: #{g_downsampling_block.1} parent=31 // pred_check_branch
        %180 = sbr.rel (%p178) target = $region36
      $region35: #{g_downsampling_block.1} parent=31 // pred_region
        %p181 = scmp.lt.s32.totalorder %s11, 1
        %s182 = scalar_select %p181, %s11, 1
        %s183 = smul.addr %s182, 18
        %s184 = smul.addr %s183, 8
        %s185 = scalar_lea.vmem %s0, %s184
      $region36: #{g_downsampling_block.1} parent=31 // pred_fallthru
        _
    $region32: #{g_downsampling_block.1} parent=5 // pred_fallthru
      _
    %p186 = scmp.le.s32.totalorder 1, %s11
    %p187 = scmp.lt.s32.totalorder %s11, 3
    %p188 = pnand %p186, %p187
    %p189 = pneg %p188
    // Predicated region
    $region37: #{g_downsampling_block.1} parent=5 // pred_check
      _
    $region38: #{g_downsampling_block.1} parent=5 // pred_check_branch
      %191 = sbr.rel (%p188) target = $region40
    $region39: #{g_downsampling_block.1} parent=5 // pred_region
      %s192 = ssub.s32 %s11, 1
      %p193 = scmp.lt.s32.totalorder %s16, 1
      %s194 = scalar_select %p193, %s16, 1
      %s195 = smul.addr %s194, 18
      %s196 = smul.addr %s195, 8
      %s197 = scalar_lea.vmem %s0, %s196
      %p198 = pneg %p37
      %p199 = pneg %p34
      %p200 = pneg %p58
      %p201 = pneg %p55
      %p202 = pneg %p79
      %p203 = pneg %p76
      %p204 = pneg %p100
      %p205 = pneg %p97
      %p206 = pneg %p121
      %p207 = pneg %p118
      %p208 = pneg %p147
      %p209 = pneg %p144
      %p210 = scmp.lt.s32.totalorder %s16, 1
      %s211 = scalar_select %p210, %s16, 1
      %s212 = smul.addr %s211, 8
      %s213 = smul.addr %s212, 8
      %s214 = scalar_lea.vmem %s5, %s213
      %p215 = scmp.lt.s32.totalorder %s16, 1
      %s216 = scalar_select %p215, %s16, 1
      %s217 = smul.addr %s216, 18
      %s218 = smul.addr %s217, 8
      %s219 = scalar_lea.vmem %s0, %s218
      %p220 = scmp.lt.s32.totalorder %s16, 1
      %s221 = scalar_select %p220, %s16, 1
      %s222 = smul.addr %s221, 8
      %s223 = smul.addr %s222, 8
      %s224 = scalar_lea.vmem %s5, %s223
      %v225 = vld [vmem:[%s219] sm:$0xff]
      %v226 = vld [vmem:[%s219 + $0x8] sm:$0x1]
      %v227 = vld [vmem:[%s219 + $0x10] sm:$0xff]
      %v228 = vld [vmem:[%s219 + $0x18] sm:$0x1]
      %v229 = vld [vmem:[%s219 + $0x20] sm:$0xff]
      %v230 = vld [vmem:[%s219 + $0x28] sm:$0x1]
      %v231 = vld [vmem:[%s219 + $0x30] sm:$0xff]
      %v232 = vld [vmem:[%s219 + $0x38] sm:$0x1]
      %v233 = vld [vmem:[%s219 + $0x40] sm:$0xff]
      %v234 = vld [vmem:[%s219 + $0x48] sm:$0x1]
      %v235 = vld [vmem:[%s219 + $0x50] sm:$0xff]
      %v236 = vld [vmem:[%s219 + $0x58] sm:$0x1]
      %v237 = vld [vmem:[%s219 + $0x60] sm:$0xff]
      %v238 = vld [vmem:[%s219 + $0x68] sm:$0x1]
      %v239 = vld [vmem:[%s219 + $0x70] sm:$0xff]
      %v240 = vld [vmem:[%s219 + $0x78] sm:$0x1]
      %v241 = vld [vmem:[%s219 + $0x80] sm:$0xff]
      %v242 = vld [vmem:[%s219 + $0x88] sm:$0x1]
      %vm259 = vcmask 1046528
      %v260 = vrot.slane %v225, 1
      %v261 = vrot.slane %v226, 1
      %v262 = vsel %vm259, %v260, %v261
      %v263 = vrot.slane %v227, 1
      %v264 = vrot.slane %v228, 1
      %v265 = vsel %vm259, %v263, %v264
      %v266 = vrot.slane %v229, 1
      %v267 = vrot.slane %v230, 1
      %v268 = vsel %vm259, %v266, %v267
      %v269 = vrot.slane %v231, 1
      %v270 = vrot.slane %v232, 1
      %v271 = vsel %vm259, %v269, %v270
      %v272 = vrot.slane %v233, 1
      %v273 = vrot.slane %v234, 1
      %v274 = vsel %vm259, %v272, %v273
      %v275 = vrot.slane %v235, 1
      %v276 = vrot.slane %v236, 1
      %v277 = vsel %vm259, %v275, %v276
      %v278 = vrot.slane %v237, 1
      %v279 = vrot.slane %v238, 1
      %v280 = vsel %vm259, %v278, %v279
      %v281 = vrot.slane %v239, 1
      %v282 = vrot.slane %v240, 1
      %v283 = vsel %vm259, %v281, %v282
      %284 = vrot.lane.b32.xlu0 %v262, 16
      %v285 = vpop.permute.xlu0 %284
      %286 = vrot.lane.b32.xlu0 %v265, 16
      %v287 = vpop.permute.xlu0 %286
      %288 = vrot.lane.b32.xlu0 %v268, 16
      %v289 = vpop.permute.xlu0 %288
      %290 = vrot.lane.b32.xlu0 %v271, 16
      %v291 = vpop.permute.xlu0 %290
      %292 = vrot.lane.b32.xlu0 %v274, 16
      %v293 = vpop.permute.xlu0 %292
      %294 = vrot.lane.b32.xlu0 %v277, 16
      %v295 = vpop.permute.xlu0 %294
      %296 = vrot.lane.b32.xlu0 %v280, 16
      %v297 = vpop.permute.xlu0 %296
      %298 = vrot.lane.b32.xlu0 %v283, 16
      %v299 = vpop.permute.xlu0 %298
      %309 = vrot.lane.b32.xlu0 %v227, 32
      %v310 = vpop.permute.xlu0 %309
      %311 = vrot.lane.b32.xlu0 %v229, 32
      %v312 = vpop.permute.xlu0 %311
      %313 = vrot.lane.b32.xlu0 %v231, 32
      %v314 = vpop.permute.xlu0 %313
      %315 = vrot.lane.b32.xlu0 %v233, 32
      %v316 = vpop.permute.xlu0 %315
      %317 = vrot.lane.b32.xlu0 %v235, 32
      %v318 = vpop.permute.xlu0 %317
      %319 = vrot.lane.b32.xlu0 %v237, 32
      %v320 = vpop.permute.xlu0 %319
      %321 = vrot.lane.b32.xlu0 %v239, 32
      %v322 = vpop.permute.xlu0 %321
      %323 = vrot.lane.b32.xlu0 %v241, 32
      %v324 = vpop.permute.xlu0 %323
      %v334 = vrot.slane %v241, 1
      %v335 = vrot.slane %v242, 1
      %v336 = vsel %vm259, %v334, %v335
      %337 = vrot.lane.b32.xlu0 %v265, 48
      %v338 = vpop.permute.xlu0 %337
      %339 = vrot.lane.b32.xlu0 %v268, 48
      %v340 = vpop.permute.xlu0 %339
      %341 = vrot.lane.b32.xlu0 %v271, 48
      %v342 = vpop.permute.xlu0 %341
      %343 = vrot.lane.b32.xlu0 %v274, 48
      %v344 = vpop.permute.xlu0 %343
      %345 = vrot.lane.b32.xlu0 %v277, 48
      %v346 = vpop.permute.xlu0 %345
      %347 = vrot.lane.b32.xlu0 %v280, 48
      %v348 = vpop.permute.xlu0 %347
      %349 = vrot.lane.b32.xlu0 %v283, 48
      %v350 = vpop.permute.xlu0 %349
      %351 = vrot.lane.b32.xlu0 %v336, 48
      %v352 = vpop.permute.xlu0 %351
      %vm361 = vcmask 130048
      %v362 = vsel %vm361, %v225, %v285
      %v363 = vsel %vm361, %v227, %v287
      %v364 = vsel %vm361, %v229, %v289
      %v365 = vsel %vm361, %v231, %v291
      %v366 = vsel %vm361, %v233, %v293
      %v367 = vsel %vm361, %v235, %v295
      %v368 = vsel %vm361, %v237, %v297
      %v369 = vsel %vm361, %v239, %v299
      %vm370 = vcmask 261120
      %v371 = vsel %vm370, %v362, %v310
      %v372 = vsel %vm370, %v363, %v312
      %v373 = vsel %vm370, %v364, %v314
      %v374 = vsel %vm370, %v365, %v316
      %v375 = vsel %vm370, %v366, %v318
      %v376 = vsel %vm370, %v367, %v320
      %v377 = vsel %vm370, %v368, %v322
      %v378 = vsel %vm370, %v369, %v324
      %vm379 = vcmask 392192
      %v380 = vsel %vm379, %v371, %v338
      %v381 = vsel %vm379, %v372, %v340
      %v382 = vsel %vm379, %v373, %v342
      %v383 = vsel %vm379, %v374, %v344
      %v384 = vsel %vm379, %v375, %v346
      %v385 = vsel %vm379, %v376, %v348
      %v386 = vsel %vm379, %v377, %v350
      %v387 = vsel %vm379, %v378, %v352
      %v388 = vld [vmem:[%s1] sm:$0xff]
      %v389 = vld [vmem:[%s1 + $0x8] sm:$0xff]
      %v390 = vld [vmem:[%s1 + $0x10] sm:$0xff]
      %v391 = vld [vmem:[%s1 + $0x18] sm:$0xff]
      %v392 = vld [vmem:[%s1 + $0x20] sm:$0xff]
      %v393 = vld [vmem:[%s1 + $0x28] sm:$0xff]
      %v394 = vld [vmem:[%s1 + $0x30] sm:$0xff]
      %v395 = vld [vmem:[%s1 + $0x38] sm:$0xff]
      %v396 = vld [vmem:[%s2] sm:$0x1]
      %v398 = vperm.slane %v396, 0
      %vm400 = vcmask 523264
      %v402 = vsel %vm400, %v380, 0
      %v405 = vsel %vm400, %v381, 0
      %v408 = vsel %vm400, %v382, 0
      %v411 = vsel %vm400, %v383, 0
      %v414 = vsel %vm400, %v384, 0
      %v417 = vsel %vm400, %v385, 0
      %v420 = vsel %vm400, %v386, 0
      %v423 = vsel %vm400, %v387, 0
      %425 = vmatpush.msra.mxu0 0.0
      %426 = vmatpush.msra.mxu0 0.0
      %427 = vmatpush.msra.mxu0 0.0
      %428 = vmatpush.msra.mxu0 0.0
      %429 = vmatpush.msra.mxu0 0.0
      %430 = vmatpush.msra.mxu0 0.0
      %431 = vmatpush.msra.mxu0 0.0
      %432 = vmatpush.msra.mxu0 0.0
      %433 = vmatpush.msra.mxu0 %v395
      %434 = vmatpush.msra.mxu0 %v394
      %435 = vmatpush.msra.mxu0 %v393
      %436 = vmatpush.msra.mxu0 %v392
      %437 = vmatpush.msra.mxu0 %v391
      %438 = vmatpush.msra.mxu0 %v390
      %439 = vmatpush.msra.mxu0 %v389
      %440 = vmatpush.msra.mxu0 %v388
      %441 = vmatmul.f32.gmra.mxu0 %v402
      %v442 = vpop.f32.mrf.mxu0
      %v443 = vadd.f32 %v398, %v442
      %444 = vmatmul.f32.gmra.mxu0 %v405
      %v445 = vpop.f32.mrf.mxu0
      %v446 = vadd.f32 %v398, %v445
      %447 = vmatmul.f32.gmra.mxu0 %v408
      %v448 = vpop.f32.mrf.mxu0
      %v449 = vadd.f32 %v398, %v448
      %450 = vmatmul.f32.gmra.mxu0 %v411
      %v451 = vpop.f32.mrf.mxu0
      %v452 = vadd.f32 %v398, %v451
      %453 = vmatmul.f32.gmra.mxu0 %v414
      %v454 = vpop.f32.mrf.mxu0
      %v455 = vadd.f32 %v398, %v454
      %456 = vmatmul.f32.gmra.mxu0 %v417
      %v457 = vpop.f32.mrf.mxu0
      %v458 = vadd.f32 %v398, %v457
      %459 = vmatmul.f32.gmra.mxu0 %v420
      %v460 = vpop.f32.mrf.mxu0
      %v461 = vadd.f32 %v398, %v460
      %462 = vmatmul.f32.gmra.mxu0 %v423
      %v463 = vpop.f32.mrf.mxu0
      %v464 = vadd.f32 %v398, %v463
      %465 = vdwg.mxu0
      %vm466 = vcmp.gt.f32.partialorder %v443, 0.0
      %vm467 = vcmp.gt.f32.partialorder %v446, 0.0
      %vm468 = vcmp.gt.f32.partialorder %v449, 0.0
      %vm469 = vcmp.gt.f32.partialorder %v452, 0.0
      %vm470 = vcmp.gt.f32.partialorder %v455, 0.0
      %vm471 = vcmp.gt.f32.partialorder %v458, 0.0
      %vm472 = vcmp.gt.f32.partialorder %v461, 0.0
      %vm473 = vcmp.gt.f32.partialorder %v464, 0.0
      %v474 = vmin.f32 %v443, 0.0
      %v475 = vmin.f32 %v446, 0.0
      %v476 = vmin.f32 %v449, 0.0
      %v477 = vmin.f32 %v452, 0.0
      %v478 = vmin.f32 %v455, 0.0
      %v479 = vmin.f32 %v458, 0.0
      %v480 = vmin.f32 %v461, 0.0
      %v481 = vmin.f32 %v464, 0.0
      %v482 = vmul.f32 %v474, 1.442695
      %v483 = vpow.pop %v482
      %v484 = vmul.f32 %v475, 1.442695
      %v485 = vpow.pop %v484
      %v486 = vmul.f32 %v476, 1.442695
      %v487 = vpow.pop %v486
      %v488 = vmul.f32 %v477, 1.442695
      %v489 = vpow.pop %v488
      %v490 = vmul.f32 %v478, 1.442695
      %v491 = vpow.pop %v490
      %v492 = vmul.f32 %v479, 1.442695
      %v493 = vpow.pop %v492
      %v494 = vmul.f32 %v480, 1.442695
      %v495 = vpow.pop %v494
      %v496 = vmul.f32 %v481, 1.442695
      %v497 = vpow.pop %v496
      %v498 = vsub.f32 %v483, 1.0
      %v499 = vsub.f32 %v485, 1.0
      %v500 = vsub.f32 %v487, 1.0
      %v501 = vsub.f32 %v489, 1.0
      %v502 = vsub.f32 %v491, 1.0
      %v503 = vsub.f32 %v493, 1.0
      %v504 = vsub.f32 %v495, 1.0
      %v505 = vsub.f32 %v497, 1.0
      %v506 = vsel %vm466, %v443, %v498
      %v507 = vsel %vm467, %v446, %v499
      %v508 = vsel %vm468, %v449, %v500
      %v509 = vsel %vm469, %v452, %v501
      %v510 = vsel %vm470, %v455, %v502
      %v511 = vsel %vm471, %v458, %v503
      %v512 = vsel %vm472, %v461, %v504
      %v513 = vsel %vm473, %v464, %v505
      %v514 = vxor.u32 %v443, 2147483648
      %v515 = vxor.u32 %v446, 2147483648
      %v516 = vxor.u32 %v449, 2147483648
      %v517 = vxor.u32 %v452, 2147483648
      %v518 = vxor.u32 %v455, 2147483648
      %v519 = vxor.u32 %v458, 2147483648
      %v520 = vxor.u32 %v461, 2147483648
      %v521 = vxor.u32 %v464, 2147483648
      %v522 = vmul.f32 %v514, 1.442695
      %v523 = vpow.pop %v522
      %v524 = vmul.f32 %v515, 1.442695
      %v525 = vpow.pop %v524
      %v526 = vmul.f32 %v516, 1.442695
      %v527 = vpow.pop %v526
      %v528 = vmul.f32 %v517, 1.442695
      %v529 = vpow.pop %v528
      %v530 = vmul.f32 %v518, 1.442695
      %v531 = vpow.pop %v530
      %v532 = vmul.f32 %v519, 1.442695
      %v533 = vpow.pop %v532
      %v534 = vmul.f32 %v520, 1.442695
      %v535 = vpow.pop %v534
      %v536 = vmul.f32 %v521, 1.442695
      %v537 = vpow.pop %v536
      %v538 = vadd.f32 %v523, 1.0
      %v539 = vadd.f32 %v525, 1.0
      %v540 = vadd.f32 %v527, 1.0
      %v541 = vadd.f32 %v529, 1.0
      %v542 = vadd.f32 %v531, 1.0
      %v543 = vadd.f32 %v533, 1.0
      %v544 = vadd.f32 %v535, 1.0
      %v545 = vadd.f32 %v537, 1.0
      %v546 = vrcp.pop %v538
      %v547 = vmul.f32 %v538, %v546
      %v548 = vsub.f32 1.0, %v547
      %v549 = vmul.f32 %v546, %v548
      %v550 = vadd.f32 %v546, %v549
      %vm551 = vweird.f32 %v538
      %vm552 = vweird.f32 %v546
      %vm553 = vmor %vm551, %vm552
      %v554 = vsel %vm553, %v546, %v550
      %v555 = vand.u32 2147483647, %v538
      %vm556 = vcmp.eq.f32.partialorder %v555, 8.507059e+37
      %v557 = vand.u32 %v538, 2147483648
      %v558 = vor.u32 1.1754944e-38, %v557
      %v559 = vsel %vm556, %v558, %v554
      %v560 = vmul.f32 1.0, %v559
      %v561 = vrcp.pop %v539
      %v562 = vmul.f32 %v539, %v561
      %v563 = vsub.f32 1.0, %v562
      %v564 = vmul.f32 %v561, %v563
      %v565 = vadd.f32 %v561, %v564
      %vm566 = vweird.f32 %v539
      %vm567 = vweird.f32 %v561
      %vm568 = vmor %vm566, %vm567
      %v569 = vsel %vm568, %v561, %v565
      %v570 = vand.u32 2147483647, %v539
      %vm571 = vcmp.eq.f32.partialorder %v570, 8.507059e+37
      %v572 = vand.u32 %v539, 2147483648
      %v573 = vor.u32 1.1754944e-38, %v572
      %v574 = vsel %vm571, %v573, %v569
      %v575 = vmul.f32 1.0, %v574
      %v576 = vrcp.pop %v540
      %v577 = vmul.f32 %v540, %v576
      %v578 = vsub.f32 1.0, %v577
      %v579 = vmul.f32 %v576, %v578
      %v580 = vadd.f32 %v576, %v579
      %vm581 = vweird.f32 %v540
      %vm582 = vweird.f32 %v576
      %vm583 = vmor %vm581, %vm582
      %v584 = vsel %vm583, %v576, %v580
      %v585 = vand.u32 2147483647, %v540
      %vm586 = vcmp.eq.f32.partialorder %v585, 8.507059e+37
      %v587 = vand.u32 %v540, 2147483648
      %v588 = vor.u32 1.1754944e-38, %v587
      %v589 = vsel %vm586, %v588, %v584
      %v590 = vmul.f32 1.0, %v589
      %v591 = vrcp.pop %v541
      %v592 = vmul.f32 %v541, %v591
      %v593 = vsub.f32 1.0, %v592
      %v594 = vmul.f32 %v591, %v593
      %v595 = vadd.f32 %v591, %v594
      %vm596 = vweird.f32 %v541
      %vm597 = vweird.f32 %v591
      %vm598 = vmor %vm596, %vm597
      %v599 = vsel %vm598, %v591, %v595
      %v600 = vand.u32 2147483647, %v541
      %vm601 = vcmp.eq.f32.partialorder %v600, 8.507059e+37
      %v602 = vand.u32 %v541, 2147483648
      %v603 = vor.u32 1.1754944e-38, %v602
      %v604 = vsel %vm601, %v603, %v599
      %v605 = vmul.f32 1.0, %v604
      %v606 = vrcp.pop %v542
      %v607 = vmul.f32 %v542, %v606
      %v608 = vsub.f32 1.0, %v607
      %v609 = vmul.f32 %v606, %v608
      %v610 = vadd.f32 %v606, %v609
      %vm611 = vweird.f32 %v542
      %vm612 = vweird.f32 %v606
      %vm613 = vmor %vm611, %vm612
      %v614 = vsel %vm613, %v606, %v610
      %v615 = vand.u32 2147483647, %v542
      %vm616 = vcmp.eq.f32.partialorder %v615, 8.507059e+37
      %v617 = vand.u32 %v542, 2147483648
      %v618 = vor.u32 1.1754944e-38, %v617
      %v619 = vsel %vm616, %v618, %v614
      %v620 = vmul.f32 1.0, %v619
      %v621 = vrcp.pop %v543
      %v622 = vmul.f32 %v543, %v621
      %v623 = vsub.f32 1.0, %v622
      %v624 = vmul.f32 %v621, %v623
      %v625 = vadd.f32 %v621, %v624
      %vm626 = vweird.f32 %v543
      %vm627 = vweird.f32 %v621
      %vm628 = vmor %vm626, %vm627
      %v629 = vsel %vm628, %v621, %v625
      %v630 = vand.u32 2147483647, %v543
      %vm631 = vcmp.eq.f32.partialorder %v630, 8.507059e+37
      %v632 = vand.u32 %v543, 2147483648
      %v633 = vor.u32 1.1754944e-38, %v632
      %v634 = vsel %vm631, %v633, %v629
      %v635 = vmul.f32 1.0, %v634
      %v636 = vrcp.pop %v544
      %v637 = vmul.f32 %v544, %v636
      %v638 = vsub.f32 1.0, %v637
      %v639 = vmul.f32 %v636, %v638
      %v640 = vadd.f32 %v636, %v639
      %vm641 = vweird.f32 %v544
      %vm642 = vweird.f32 %v636
      %vm643 = vmor %vm641, %vm642
      %v644 = vsel %vm643, %v636, %v640
      %v645 = vand.u32 2147483647, %v544
      %vm646 = vcmp.eq.f32.partialorder %v645, 8.507059e+37
      %v647 = vand.u32 %v544, 2147483648
      %v648 = vor.u32 1.1754944e-38, %v647
      %v649 = vsel %vm646, %v648, %v644
      %v650 = vmul.f32 1.0, %v649
      %v651 = vrcp.pop %v545
      %v652 = vmul.f32 %v545, %v651
      %v653 = vsub.f32 1.0, %v652
      %v654 = vmul.f32 %v651, %v653
      %v655 = vadd.f32 %v651, %v654
      %vm656 = vweird.f32 %v545
      %vm657 = vweird.f32 %v651
      %vm658 = vmor %vm656, %vm657
      %v659 = vsel %vm658, %v651, %v655
      %v660 = vand.u32 2147483647, %v545
      %vm661 = vcmp.eq.f32.partialorder %v660, 8.507059e+37
      %v662 = vand.u32 %v545, 2147483648
      %v663 = vor.u32 1.1754944e-38, %v662
      %v664 = vsel %vm661, %v663, %v659
      %v665 = vmul.f32 1.0, %v664
      %674 = vrot.lane.b32.xlu0 %v560, 120
      %v675 = vpop.permute.xlu0 %674
      %676 = vrot.lane.b32.xlu0 %v575, 120
      %v677 = vpop.permute.xlu0 %676
      %678 = vrot.lane.b32.xlu0 %v590, 120
      %v679 = vpop.permute.xlu0 %678
      %680 = vrot.lane.b32.xlu0 %v605, 120
      %v681 = vpop.permute.xlu0 %680
      %682 = vrot.lane.b32.xlu0 %v620, 120
      %v683 = vpop.permute.xlu0 %682
      %684 = vrot.lane.b32.xlu0 %v635, 120
      %v685 = vpop.permute.xlu0 %684
      %686 = vrot.lane.b32.xlu0 %v650, 120
      %v687 = vpop.permute.xlu0 %686
      %688 = vrot.lane.b32.xlu0 %v665, 120
      %v689 = vpop.permute.xlu0 %688
      %v698 = vmul.f32 %v506, %v675
      %v699 = vmul.f32 %v507, %v677
      %v700 = vmul.f32 %v508, %v679
      %v701 = vmul.f32 %v509, %v681
      %v702 = vmul.f32 %v510, %v683
      %v703 = vmul.f32 %v511, %v685
      %v704 = vmul.f32 %v512, %v687
      %v705 = vmul.f32 %v513, %v689
      %vm706 = vcmask 64512
      %707 = vst.msk [vmem:[#allocation2] sm:$0xff] %vm706, 0.0
      %vm708 = vcmask 58368
      %709 = vst.msk [vmem:[#allocation2 + $0x8] sm:$0x3] %vm708, 0.0
      %710 = vst.msk [vmem:[#allocation2 + $0x10] sm:$0xff] %vm706, 0.0
      %711 = vst.msk [vmem:[#allocation2 + $0x18] sm:$0x3] %vm708, 0.0
      %712 = vst.msk [vmem:[#allocation2 + $0x20] sm:$0xff] %vm706, 0.0
      %713 = vst.msk [vmem:[#allocation2 + $0x28] sm:$0x3] %vm708, 0.0
      %714 = vst.msk [vmem:[#allocation2 + $0x30] sm:$0xff] %vm706, 0.0
      %715 = vst.msk [vmem:[#allocation2 + $0x38] sm:$0x3] %vm708, 0.0
      %716 = vst.msk [vmem:[#allocation2 + $0x40] sm:$0xff] %vm706, 0.0
      %717 = vst.msk [vmem:[#allocation2 + $0x48] sm:$0x3] %vm708, 0.0
      %718 = vst.msk [vmem:[#allocation2 + $0x50] sm:$0xff] %vm706, 0.0
      %719 = vst.msk [vmem:[#allocation2 + $0x58] sm:$0x3] %vm708, 0.0
      %720 = vst.msk [vmem:[#allocation2 + $0x60] sm:$0xff] %vm706, 0.0
      %721 = vst.msk [vmem:[#allocation2 + $0x68] sm:$0x3] %vm708, 0.0
      %722 = vst.msk [vmem:[#allocation2 + $0x70] sm:$0xff] %vm706, 0.0
      %723 = vst.msk [vmem:[#allocation2 + $0x78] sm:$0x3] %vm708, 0.0
      %724 = vst.msk [vmem:[#allocation2 + $0x80] sm:$0xff] %vm706, 0.0
      %725 = vst.msk [vmem:[#allocation2 + $0x88] sm:$0x3] %vm708, 0.0
      %726 = vst.msk [vmem:[#allocation2 + $0x90] sm:$0xff] %vm706, 0.0
      %727 = vst.msk [vmem:[#allocation2 + $0x98] sm:$0x3] %vm708, 0.0
      %s728 = scalar_lea.vmem [#allocation2], 16
      %729 = vst.msk [vmem:[%s728 + $0x1] sm:$0xff] %vm706, %v698
      %730 = vst.msk [vmem:[%s728 + $0x11] sm:$0xff] %vm706, %v699
      %731 = vst.msk [vmem:[%s728 + $0x21] sm:$0xff] %vm706, %v700
      %732 = vst.msk [vmem:[%s728 + $0x31] sm:$0xff] %vm706, %v701
      %733 = vst.msk [vmem:[%s728 + $0x41] sm:$0xff] %vm706, %v702
      %734 = vst.msk [vmem:[%s728 + $0x51] sm:$0xff] %vm706, %v703
      %735 = vst.msk [vmem:[%s728 + $0x61] sm:$0xff] %vm706, %v704
      %736 = vst.msk [vmem:[%s728 + $0x71] sm:$0xff] %vm706, %v705
      %v737 = vld [vmem:[#allocation2] sm:$0xff]
      %v738 = vld [vmem:[#allocation2 + $0x8] sm:$0x3]
      %v739 = vld [vmem:[#allocation2 + $0x10] sm:$0xff]
      %v740 = vld [vmem:[#allocation2 + $0x18] sm:$0x3]
      %v741 = vld [vmem:[#allocation2 + $0x20] sm:$0xff]
      %v742 = vld [vmem:[#allocation2 + $0x28] sm:$0x3]
      %v743 = vld [vmem:[#allocation2 + $0x30] sm:$0xff]
      %v744 = vld [vmem:[#allocation2 + $0x38] sm:$0x3]
      %v745 = vld [vmem:[#allocation2 + $0x40] sm:$0xff]
      %v746 = vld [vmem:[#allocation2 + $0x48] sm:$0x3]
      %v747 = vld [vmem:[#allocation2 + $0x50] sm:$0xff]
      %v748 = vld [vmem:[#allocation2 + $0x58] sm:$0x3]
      %v749 = vld [vmem:[#allocation2 + $0x60] sm:$0xff]
      %v750 = vld [vmem:[#allocation2 + $0x68] sm:$0x3]
      %v751 = vld [vmem:[#allocation2 + $0x70] sm:$0xff]
      %v752 = vld [vmem:[#allocation2 + $0x78] sm:$0x3]
      %v753 = vld [vmem:[#allocation2 + $0x80] sm:$0xff]
      %v754 = vld [vmem:[#allocation2 + $0x88] sm:$0x3]
      %v755 = vld [vmem:[#allocation2 + $0x90] sm:$0xff]
      %v756 = vld [vmem:[#allocation2 + $0x98] sm:$0x3]
      %v773 = vrot.slane %v737, 1
      %v774 = vrot.slane %v738, 1
      %v775 = vsel %vm259, %v773, %v774
      %v776 = vrot.slane %v739, 1
      %v777 = vrot.slane %v740, 1
      %v778 = vsel %vm259, %v776, %v777
      %v779 = vrot.slane %v741, 1
      %v780 = vrot.slane %v742, 1
      %v781 = vsel %vm259, %v779, %v780
      %v782 = vrot.slane %v743, 1
      %v783 = vrot.slane %v744, 1
      %v784 = vsel %vm259, %v782, %v783
      %v785 = vrot.slane %v745, 1
      %v786 = vrot.slane %v746, 1
      %v787 = vsel %vm259, %v785, %v786
      %v788 = vrot.slane %v747, 1
      %v789 = vrot.slane %v748, 1
      %v790 = vsel %vm259, %v788, %v789
      %v791 = vrot.slane %v749, 1
      %v792 = vrot.slane %v750, 1
      %v793 = vsel %vm259, %v791, %v792
      %v794 = vrot.slane %v751, 1
      %v795 = vrot.slane %v752, 1
      %v796 = vsel %vm259, %v794, %v795
      %797 = vrot.lane.b32.xlu0 %v775, 8
      %v798 = vpop.permute.xlu0 %797
      %799 = vrot.lane.b32.xlu0 %v778, 8
      %v800 = vpop.permute.xlu0 %799
      %801 = vrot.lane.b32.xlu0 %v781, 8
      %v802 = vpop.permute.xlu0 %801
      %803 = vrot.lane.b32.xlu0 %v784, 8
      %v804 = vpop.permute.xlu0 %803
      %805 = vrot.lane.b32.xlu0 %v787, 8
      %v806 = vpop.permute.xlu0 %805
      %807 = vrot.lane.b32.xlu0 %v790, 8
      %v808 = vpop.permute.xlu0 %807
      %809 = vrot.lane.b32.xlu0 %v793, 8
      %v810 = vpop.permute.xlu0 %809
      %811 = vrot.lane.b32.xlu0 %v796, 8
      %v812 = vpop.permute.xlu0 %811
      %vm821 = vcmask 1045504
      %v822 = vrot.slane %v737, 2
      %v823 = vrot.slane %v738, 2
      %v824 = vsel %vm821, %v822, %v823
      %v825 = vrot.slane %v739, 2
      %v826 = vrot.slane %v740, 2
      %v827 = vsel %vm821, %v825, %v826
      %v828 = vrot.slane %v741, 2
      %v829 = vrot.slane %v742, 2
      %v830 = vsel %vm821, %v828, %v829
      %v831 = vrot.slane %v743, 2
      %v832 = vrot.slane %v744, 2
      %v833 = vsel %vm821, %v831, %v832
      %v834 = vrot.slane %v745, 2
      %v835 = vrot.slane %v746, 2
      %v836 = vsel %vm821, %v834, %v835
      %v837 = vrot.slane %v747, 2
      %v838 = vrot.slane %v748, 2
      %v839 = vsel %vm821, %v837, %v838
      %v840 = vrot.slane %v749, 2
      %v841 = vrot.slane %v750, 2
      %v842 = vsel %vm821, %v840, %v841
      %v843 = vrot.slane %v751, 2
      %v844 = vrot.slane %v752, 2
      %v845 = vsel %vm821, %v843, %v844
      %846 = vrot.lane.b32.xlu0 %v824, 16
      %v847 = vpop.permute.xlu0 %846
      %848 = vrot.lane.b32.xlu0 %v827, 16
      %v849 = vpop.permute.xlu0 %848
      %850 = vrot.lane.b32.xlu0 %v830, 16
      %v851 = vpop.permute.xlu0 %850
      %852 = vrot.lane.b32.xlu0 %v833, 16
      %v853 = vpop.permute.xlu0 %852
      %854 = vrot.lane.b32.xlu0 %v836, 16
      %v855 = vpop.permute.xlu0 %854
      %856 = vrot.lane.b32.xlu0 %v839, 16
      %v857 = vpop.permute.xlu0 %856
      %858 = vrot.lane.b32.xlu0 %v842, 16
      %v859 = vpop.permute.xlu0 %858
      %860 = vrot.lane.b32.xlu0 %v845, 16
      %v861 = vpop.permute.xlu0 %860
      %871 = vrot.lane.b32.xlu0 %v739, 24
      %v872 = vpop.permute.xlu0 %871
      %873 = vrot.lane.b32.xlu0 %v741, 24
      %v874 = vpop.permute.xlu0 %873
      %875 = vrot.lane.b32.xlu0 %v743, 24
      %v876 = vpop.permute.xlu0 %875
      %877 = vrot.lane.b32.xlu0 %v745, 24
      %v878 = vpop.permute.xlu0 %877
      %879 = vrot.lane.b32.xlu0 %v747, 24
      %v880 = vpop.permute.xlu0 %879
      %881 = vrot.lane.b32.xlu0 %v749, 24
      %v882 = vpop.permute.xlu0 %881
      %883 = vrot.lane.b32.xlu0 %v751, 24
      %v884 = vpop.permute.xlu0 %883
      %885 = vrot.lane.b32.xlu0 %v753, 24
      %v886 = vpop.permute.xlu0 %885
      %v896 = vrot.slane %v753, 1
      %v897 = vrot.slane %v754, 1
      %v898 = vsel %vm259, %v896, %v897
      %899 = vrot.lane.b32.xlu0 %v778, 32
      %v900 = vpop.permute.xlu0 %899
      %901 = vrot.lane.b32.xlu0 %v781, 32
      %v902 = vpop.permute.xlu0 %901
      %903 = vrot.lane.b32.xlu0 %v784, 32
      %v904 = vpop.permute.xlu0 %903
      %905 = vrot.lane.b32.xlu0 %v787, 32
      %v906 = vpop.permute.xlu0 %905
      %907 = vrot.lane.b32.xlu0 %v790, 32
      %v908 = vpop.permute.xlu0 %907
      %909 = vrot.lane.b32.xlu0 %v793, 32
      %v910 = vpop.permute.xlu0 %909
      %911 = vrot.lane.b32.xlu0 %v796, 32
      %v912 = vpop.permute.xlu0 %911
      %913 = vrot.lane.b32.xlu0 %v898, 32
      %v914 = vpop.permute.xlu0 %913
      %v923 = vrot.slane %v753, 2
      %v924 = vrot.slane %v754, 2
      %v925 = vsel %vm821, %v923, %v924
      %926 = vrot.lane.b32.xlu0 %v827, 40
      %v927 = vpop.permute.xlu0 %926
      %928 = vrot.lane.b32.xlu0 %v830, 40
      %v929 = vpop.permute.xlu0 %928
      %930 = vrot.lane.b32.xlu0 %v833, 40
      %v931 = vpop.permute.xlu0 %930
      %932 = vrot.lane.b32.xlu0 %v836, 40
      %v933 = vpop.permute.xlu0 %932
      %934 = vrot.lane.b32.xlu0 %v839, 40
      %v935 = vpop.permute.xlu0 %934
      %936 = vrot.lane.b32.xlu0 %v842, 40
      %v937 = vpop.permute.xlu0 %936
      %938 = vrot.lane.b32.xlu0 %v845, 40
      %v939 = vpop.permute.xlu0 %938
      %940 = vrot.lane.b32.xlu0 %v925, 40
      %v941 = vpop.permute.xlu0 %940
      %951 = vrot.lane.b32.xlu0 %v741, 48
      %v952 = vpop.permute.xlu0 %951
      %953 = vrot.lane.b32.xlu0 %v743, 48
      %v954 = vpop.permute.xlu0 %953
      %955 = vrot.lane.b32.xlu0 %v745, 48
      %v956 = vpop.permute.xlu0 %955
      %957 = vrot.lane.b32.xlu0 %v747, 48
      %v958 = vpop.permute.xlu0 %957
      %959 = vrot.lane.b32.xlu0 %v749, 48
      %v960 = vpop.permute.xlu0 %959
      %961 = vrot.lane.b32.xlu0 %v751, 48
      %v962 = vpop.permute.xlu0 %961
      %963 = vrot.lane.b32.xlu0 %v753, 48
      %v964 = vpop.permute.xlu0 %963
      %965 = vrot.lane.b32.xlu0 %v755, 48
      %v966 = vpop.permute.xlu0 %965
      %v976 = vrot.slane %v755, 1
      %v977 = vrot.slane %v756, 1
      %v978 = vsel %vm259, %v976, %v977
      %979 = vrot.lane.b32.xlu0 %v781, 56
      %v980 = vpop.permute.xlu0 %979
      %981 = vrot.lane.b32.xlu0 %v784, 56
      %v982 = vpop.permute.xlu0 %981
      %983 = vrot.lane.b32.xlu0 %v787, 56
      %v984 = vpop.permute.xlu0 %983
      %985 = vrot.lane.b32.xlu0 %v790, 56
      %v986 = vpop.permute.xlu0 %985
      %987 = vrot.lane.b32.xlu0 %v793, 56
      %v988 = vpop.permute.xlu0 %987
      %989 = vrot.lane.b32.xlu0 %v796, 56
      %v990 = vpop.permute.xlu0 %989
      %991 = vrot.lane.b32.xlu0 %v898, 56
      %v992 = vpop.permute.xlu0 %991
      %993 = vrot.lane.b32.xlu0 %v978, 56
      %v994 = vpop.permute.xlu0 %993
      %v1003 = vrot.slane %v755, 2
      %v1004 = vrot.slane %v756, 2
      %v1005 = vsel %vm821, %v1003, %v1004
      %1006 = vrot.lane.b32.xlu0 %v830, 64
      %v1007 = vpop.permute.xlu0 %1006
      %1008 = vrot.lane.b32.xlu0 %v833, 64
      %v1009 = vpop.permute.xlu0 %1008
      %1010 = vrot.lane.b32.xlu0 %v836, 64
      %v1011 = vpop.permute.xlu0 %1010
      %1012 = vrot.lane.b32.xlu0 %v839, 64
      %v1013 = vpop.permute.xlu0 %1012
      %1014 = vrot.lane.b32.xlu0 %v842, 64
      %v1015 = vpop.permute.xlu0 %1014
      %1016 = vrot.lane.b32.xlu0 %v845, 64
      %v1017 = vpop.permute.xlu0 %1016
      %1018 = vrot.lane.b32.xlu0 %v925, 64
      %v1019 = vpop.permute.xlu0 %1018
      %1020 = vrot.lane.b32.xlu0 %v1005, 64
      %v1021 = vpop.permute.xlu0 %1020
      %v1030 = vsel %vm706, %v737, %v798
      %v1031 = vsel %vm706, %v739, %v800
      %v1032 = vsel %vm706, %v741, %v802
      %v1033 = vsel %vm706, %v743, %v804
      %v1034 = vsel %vm706, %v745, %v806
      %v1035 = vsel %vm706, %v747, %v808
      %v1036 = vsel %vm706, %v749, %v810
      %v1037 = vsel %vm706, %v751, %v812
      %v1038 = vsel %vm361, %v1030, %v847
      %v1039 = vsel %vm361, %v1031, %v849
      %v1040 = vsel %vm361, %v1032, %v851
      %v1041 = vsel %vm361, %v1033, %v853
      %v1042 = vsel %vm361, %v1034, %v855
      %v1043 = vsel %vm361, %v1035, %v857
      %v1044 = vsel %vm361, %v1036, %v859
      %v1045 = vsel %vm361, %v1037, %v861
      %vm1046 = vcmask 195584
      %v1047 = vsel %vm1046, %v1038, %v872
      %v1048 = vsel %vm1046, %v1039, %v874
      %v1049 = vsel %vm1046, %v1040, %v876
      %v1050 = vsel %vm1046, %v1041, %v878
      %v1051 = vsel %vm1046, %v1042, %v880
      %v1052 = vsel %vm1046, %v1043, %v882
      %v1053 = vsel %vm1046, %v1044, %v884
      %v1054 = vsel %vm1046, %v1045, %v886
      %v1055 = vsel %vm370, %v1047, %v900
      %v1056 = vsel %vm370, %v1048, %v902
      %v1057 = vsel %vm370, %v1049, %v904
      %v1058 = vsel %vm370, %v1050, %v906
      %v1059 = vsel %vm370, %v1051, %v908
      %v1060 = vsel %vm370, %v1052, %v910
      %v1061 = vsel %vm370, %v1053, %v912
      %v1062 = vsel %vm370, %v1054, %v914
      %vm1063 = vcmask 326656
      %v1064 = vsel %vm1063, %v1055, %v927
      %v1065 = vsel %vm1063, %v1056, %v929
      %v1066 = vsel %vm1063, %v1057, %v931
      %v1067 = vsel %vm1063, %v1058, %v933
      %v1068 = vsel %vm1063, %v1059, %v935
      %v1069 = vsel %vm1063, %v1060, %v937
      %v1070 = vsel %vm1063, %v1061, %v939
      %v1071 = vsel %vm1063, %v1062, %v941
      %v1072 = vsel %vm379, %v1064, %v952
      %v1073 = vsel %vm379, %v1065, %v954
      %v1074 = vsel %vm379, %v1066, %v956
      %v1075 = vsel %vm379, %v1067, %v958
      %v1076 = vsel %vm379, %v1068, %v960
      %v1077 = vsel %vm379, %v1069, %v962
      %v1078 = vsel %vm379, %v1070, %v964
      %v1079 = vsel %vm379, %v1071, %v966
      %vm1080 = vcmask 457728
      %v1081 = vsel %vm1080, %v1072, %v980
      %v1082 = vsel %vm1080, %v1073, %v982
      %v1083 = vsel %vm1080, %v1074, %v984
      %v1084 = vsel %vm1080, %v1075, %v986
      %v1085 = vsel %vm1080, %v1076, %v988
      %v1086 = vsel %vm1080, %v1077, %v990
      %v1087 = vsel %vm1080, %v1078, %v992
      %v1088 = vsel %vm1080, %v1079, %v994
      %v1089 = vsel %vm400, %v1081, %v1007
      %v1090 = vsel %vm400, %v1082, %v1009
      %v1091 = vsel %vm400, %v1083, %v1011
      %v1092 = vsel %vm400, %v1084, %v1013
      %v1093 = vsel %vm400, %v1085, %v1015
      %v1094 = vsel %vm400, %v1086, %v1017
      %v1095 = vsel %vm400, %v1087, %v1019
      %v1096 = vsel %vm400, %v1088, %v1021
      %v1097 = vld [vmem:[%s3] sm:$0xff]
      %v1098 = vld [vmem:[%s3 + $0x8] sm:$0xff]
      %v1099 = vld [vmem:[%s3 + $0x10] sm:$0xff]
      %v1100 = vld [vmem:[%s3 + $0x18] sm:$0xff]
      %v1101 = vld [vmem:[%s3 + $0x20] sm:$0xff]
      %v1102 = vld [vmem:[%s3 + $0x28] sm:$0xff]
      %v1103 = vld [vmem:[%s3 + $0x30] sm:$0xff]
      %v1104 = vld [vmem:[%s3 + $0x38] sm:$0xff]
      %v1105 = vld [vmem:[%s3 + $0x40] sm:$0xff]
      %v1106 = vld [vmem:[%s4] sm:$0x1]
      %v1108 = vperm.slane %v1106, 0
      %vm1110 = vcmask 588800
      %v1112 = vsel %vm1110, %v1089, 0
      %v1115 = vsel %vm1110, %v1090, 0
      %v1118 = vsel %vm1110, %v1091, 0
      %v1121 = vsel %vm1110, %v1092, 0
      %v1124 = vsel %vm1110, %v1093, 0
      %v1127 = vsel %vm1110, %v1094, 0
      %v1130 = vsel %vm1110, %v1095, 0
      %v1133 = vsel %vm1110, %v1096, 0
      %1135 = vmatpush.msra.mxu0 0.0
      %1136 = vmatpush.msra.mxu0 0.0
      %1137 = vmatpush.msra.mxu0 0.0
      %1138 = vmatpush.msra.mxu0 0.0
      %1139 = vmatpush.msra.mxu0 0.0
      %1140 = vmatpush.msra.mxu0 0.0
      %1141 = vmatpush.msra.mxu0 0.0
      %1142 = vmatpush.msra.mxu0 %v1105
      %1143 = vmatpush.msra.mxu0 %v1104
      %1144 = vmatpush.msra.mxu0 %v1103
      %1145 = vmatpush.msra.mxu0 %v1102
      %1146 = vmatpush.msra.mxu0 %v1101
      %1147 = vmatpush.msra.mxu0 %v1100
      %1148 = vmatpush.msra.mxu0 %v1099
      %1149 = vmatpush.msra.mxu0 %v1098
      %1150 = vmatpush.msra.mxu0 %v1097
      %1151 = vmatmul.f32.gmra.mxu0 %v1112
      %v1152 = vpop.f32.mrf.mxu0
      %v1153 = vadd.f32 %v1108, %v1152
      %1154 = vmatmul.f32.gmra.mxu0 %v1115
      %v1155 = vpop.f32.mrf.mxu0
      %v1156 = vadd.f32 %v1108, %v1155
      %1157 = vmatmul.f32.gmra.mxu0 %v1118
      %v1158 = vpop.f32.mrf.mxu0
      %v1159 = vadd.f32 %v1108, %v1158
      %1160 = vmatmul.f32.gmra.mxu0 %v1121
      %v1161 = vpop.f32.mrf.mxu0
      %v1162 = vadd.f32 %v1108, %v1161
      %1163 = vmatmul.f32.gmra.mxu0 %v1124
      %v1164 = vpop.f32.mrf.mxu0
      %v1165 = vadd.f32 %v1108, %v1164
      %1166 = vmatmul.f32.gmra.mxu0 %v1127
      %v1167 = vpop.f32.mrf.mxu0
      %v1168 = vadd.f32 %v1108, %v1167
      %1169 = vmatmul.f32.gmra.mxu0 %v1130
      %v1170 = vpop.f32.mrf.mxu0
      %v1171 = vadd.f32 %v1108, %v1170
      %1172 = vmatmul.f32.gmra.mxu0 %v1133
      %v1173 = vpop.f32.mrf.mxu0
      %v1174 = vadd.f32 %v1108, %v1173
      %1175 = vdwg.mxu0
      %vm1176 = vcmp.gt.f32.partialorder %v1153, 0.0
      %vm1177 = vcmp.gt.f32.partialorder %v1156, 0.0
      %vm1178 = vcmp.gt.f32.partialorder %v1159, 0.0
      %vm1179 = vcmp.gt.f32.partialorder %v1162, 0.0
      %vm1180 = vcmp.gt.f32.partialorder %v1165, 0.0
      %vm1181 = vcmp.gt.f32.partialorder %v1168, 0.0
      %vm1182 = vcmp.gt.f32.partialorder %v1171, 0.0
      %vm1183 = vcmp.gt.f32.partialorder %v1174, 0.0
      %v1184 = vmin.f32 %v1153, 0.0
      %v1185 = vmin.f32 %v1156, 0.0
      %v1186 = vmin.f32 %v1159, 0.0
      %v1187 = vmin.f32 %v1162, 0.0
      %v1188 = vmin.f32 %v1165, 0.0
      %v1189 = vmin.f32 %v1168, 0.0
      %v1190 = vmin.f32 %v1171, 0.0
      %v1191 = vmin.f32 %v1174, 0.0
      %v1192 = vmul.f32 %v1184, 1.442695
      %v1193 = vpow.pop %v1192
      %v1194 = vmul.f32 %v1185, 1.442695
      %v1195 = vpow.pop %v1194
      %v1196 = vmul.f32 %v1186, 1.442695
      %v1197 = vpow.pop %v1196
      %v1198 = vmul.f32 %v1187, 1.442695
      %v1199 = vpow.pop %v1198
      %v1200 = vmul.f32 %v1188, 1.442695
      %v1201 = vpow.pop %v1200
      %v1202 = vmul.f32 %v1189, 1.442695
      %v1203 = vpow.pop %v1202
      %v1204 = vmul.f32 %v1190, 1.442695
      %v1205 = vpow.pop %v1204
      %v1206 = vmul.f32 %v1191, 1.442695
      %v1207 = vpow.pop %v1206
      %v1208 = vsub.f32 %v1193, 1.0
      %v1209 = vsub.f32 %v1195, 1.0
      %v1210 = vsub.f32 %v1197, 1.0
      %v1211 = vsub.f32 %v1199, 1.0
      %v1212 = vsub.f32 %v1201, 1.0
      %v1213 = vsub.f32 %v1203, 1.0
      %v1214 = vsub.f32 %v1205, 1.0
      %v1215 = vsub.f32 %v1207, 1.0
      %v1216 = vsel %vm1176, %v1153, %v1208
      %v1217 = vsel %vm1177, %v1156, %v1209
      %v1218 = vsel %vm1178, %v1159, %v1210
      %v1219 = vsel %vm1179, %v1162, %v1211
      %v1220 = vsel %vm1180, %v1165, %v1212
      %v1221 = vsel %vm1181, %v1168, %v1213
      %v1222 = vsel %vm1182, %v1171, %v1214
      %v1223 = vsel %vm1183, %v1174, %v1215
      %v1224 = vxor.u32 %v1153, 2147483648
      %v1225 = vxor.u32 %v1156, 2147483648
      %v1226 = vxor.u32 %v1159, 2147483648
      %v1227 = vxor.u32 %v1162, 2147483648
      %v1228 = vxor.u32 %v1165, 2147483648
      %v1229 = vxor.u32 %v1168, 2147483648
      %v1230 = vxor.u32 %v1171, 2147483648
      %v1231 = vxor.u32 %v1174, 2147483648
      %v1232 = vmul.f32 %v1224, 1.442695
      %v1233 = vpow.pop %v1232
      %v1234 = vmul.f32 %v1225, 1.442695
      %v1235 = vpow.pop %v1234
      %v1236 = vmul.f32 %v1226, 1.442695
      %v1237 = vpow.pop %v1236
      %v1238 = vmul.f32 %v1227, 1.442695
      %v1239 = vpow.pop %v1238
      %v1240 = vmul.f32 %v1228, 1.442695
      %v1241 = vpow.pop %v1240
      %v1242 = vmul.f32 %v1229, 1.442695
      %v1243 = vpow.pop %v1242
      %v1244 = vmul.f32 %v1230, 1.442695
      %v1245 = vpow.pop %v1244
      %v1246 = vmul.f32 %v1231, 1.442695
      %v1247 = vpow.pop %v1246
      %v1248 = vadd.f32 %v1233, 1.0
      %v1249 = vadd.f32 %v1235, 1.0
      %v1250 = vadd.f32 %v1237, 1.0
      %v1251 = vadd.f32 %v1239, 1.0
      %v1252 = vadd.f32 %v1241, 1.0
      %v1253 = vadd.f32 %v1243, 1.0
      %v1254 = vadd.f32 %v1245, 1.0
      %v1255 = vadd.f32 %v1247, 1.0
      %v1256 = vrcp.pop %v1248
      %v1257 = vmul.f32 %v1248, %v1256
      %v1258 = vsub.f32 1.0, %v1257
      %v1259 = vmul.f32 %v1256, %v1258
      %v1260 = vadd.f32 %v1256, %v1259
      %vm1261 = vweird.f32 %v1248
      %vm1262 = vweird.f32 %v1256
      %vm1263 = vmor %vm1261, %vm1262
      %v1264 = vsel %vm1263, %v1256, %v1260
      %v1265 = vand.u32 2147483647, %v1248
      %vm1266 = vcmp.eq.f32.partialorder %v1265, 8.507059e+37
      %v1267 = vand.u32 %v1248, 2147483648
      %v1268 = vor.u32 1.1754944e-38, %v1267
      %v1269 = vsel %vm1266, %v1268, %v1264
      %v1270 = vmul.f32 1.0, %v1269
      %v1271 = vrcp.pop %v1249
      %v1272 = vmul.f32 %v1249, %v1271
      %v1273 = vsub.f32 1.0, %v1272
      %v1274 = vmul.f32 %v1271, %v1273
      %v1275 = vadd.f32 %v1271, %v1274
      %vm1276 = vweird.f32 %v1249
      %vm1277 = vweird.f32 %v1271
      %vm1278 = vmor %vm1276, %vm1277
      %v1279 = vsel %vm1278, %v1271, %v1275
      %v1280 = vand.u32 2147483647, %v1249
      %vm1281 = vcmp.eq.f32.partialorder %v1280, 8.507059e+37
      %v1282 = vand.u32 %v1249, 2147483648
      %v1283 = vor.u32 1.1754944e-38, %v1282
      %v1284 = vsel %vm1281, %v1283, %v1279
      %v1285 = vmul.f32 1.0, %v1284
      %v1286 = vrcp.pop %v1250
      %v1287 = vmul.f32 %v1250, %v1286
      %v1288 = vsub.f32 1.0, %v1287
      %v1289 = vmul.f32 %v1286, %v1288
      %v1290 = vadd.f32 %v1286, %v1289
      %vm1291 = vweird.f32 %v1250
      %vm1292 = vweird.f32 %v1286
      %vm1293 = vmor %vm1291, %vm1292
      %v1294 = vsel %vm1293, %v1286, %v1290
      %v1295 = vand.u32 2147483647, %v1250
      %vm1296 = vcmp.eq.f32.partialorder %v1295, 8.507059e+37
      %v1297 = vand.u32 %v1250, 2147483648
      %v1298 = vor.u32 1.1754944e-38, %v1297
      %v1299 = vsel %vm1296, %v1298, %v1294
      %v1300 = vmul.f32 1.0, %v1299
      %v1301 = vrcp.pop %v1251
      %v1302 = vmul.f32 %v1251, %v1301
      %v1303 = vsub.f32 1.0, %v1302
      %v1304 = vmul.f32 %v1301, %v1303
      %v1305 = vadd.f32 %v1301, %v1304
      %vm1306 = vweird.f32 %v1251
      %vm1307 = vweird.f32 %v1301
      %vm1308 = vmor %vm1306, %vm1307
      %v1309 = vsel %vm1308, %v1301, %v1305
      %v1310 = vand.u32 2147483647, %v1251
      %vm1311 = vcmp.eq.f32.partialorder %v1310, 8.507059e+37
      %v1312 = vand.u32 %v1251, 2147483648
      %v1313 = vor.u32 1.1754944e-38, %v1312
      %v1314 = vsel %vm1311, %v1313, %v1309
      %v1315 = vmul.f32 1.0, %v1314
      %v1316 = vrcp.pop %v1252
      %v1317 = vmul.f32 %v1252, %v1316
      %v1318 = vsub.f32 1.0, %v1317
      %v1319 = vmul.f32 %v1316, %v1318
      %v1320 = vadd.f32 %v1316, %v1319
      %vm1321 = vweird.f32 %v1252
      %vm1322 = vweird.f32 %v1316
      %vm1323 = vmor %vm1321, %vm1322
      %v1324 = vsel %vm1323, %v1316, %v1320
      %v1325 = vand.u32 2147483647, %v1252
      %vm1326 = vcmp.eq.f32.partialorder %v1325, 8.507059e+37
      %v1327 = vand.u32 %v1252, 2147483648
      %v1328 = vor.u32 1.1754944e-38, %v1327
      %v1329 = vsel %vm1326, %v1328, %v1324
      %v1330 = vmul.f32 1.0, %v1329
      %v1331 = vrcp.pop %v1253
      %v1332 = vmul.f32 %v1253, %v1331
      %v1333 = vsub.f32 1.0, %v1332
      %v1334 = vmul.f32 %v1331, %v1333
      %v1335 = vadd.f32 %v1331, %v1334
      %vm1336 = vweird.f32 %v1253
      %vm1337 = vweird.f32 %v1331
      %vm1338 = vmor %vm1336, %vm1337
      %v1339 = vsel %vm1338, %v1331, %v1335
      %v1340 = vand.u32 2147483647, %v1253
      %vm1341 = vcmp.eq.f32.partialorder %v1340, 8.507059e+37
      %v1342 = vand.u32 %v1253, 2147483648
      %v1343 = vor.u32 1.1754944e-38, %v1342
      %v1344 = vsel %vm1341, %v1343, %v1339
      %v1345 = vmul.f32 1.0, %v1344
      %v1346 = vrcp.pop %v1254
      %v1347 = vmul.f32 %v1254, %v1346
      %v1348 = vsub.f32 1.0, %v1347
      %v1349 = vmul.f32 %v1346, %v1348
      %v1350 = vadd.f32 %v1346, %v1349
      %vm1351 = vweird.f32 %v1254
      %vm1352 = vweird.f32 %v1346
      %vm1353 = vmor %vm1351, %vm1352
      %v1354 = vsel %vm1353, %v1346, %v1350
      %v1355 = vand.u32 2147483647, %v1254
      %vm1356 = vcmp.eq.f32.partialorder %v1355, 8.507059e+37
      %v1357 = vand.u32 %v1254, 2147483648
      %v1358 = vor.u32 1.1754944e-38, %v1357
      %v1359 = vsel %vm1356, %v1358, %v1354
      %v1360 = vmul.f32 1.0, %v1359
      %v1361 = vrcp.pop %v1255
      %v1362 = vmul.f32 %v1255, %v1361
      %v1363 = vsub.f32 1.0, %v1362
      %v1364 = vmul.f32 %v1361, %v1363
      %v1365 = vadd.f32 %v1361, %v1364
      %vm1366 = vweird.f32 %v1255
      %vm1367 = vweird.f32 %v1361
      %vm1368 = vmor %vm1366, %vm1367
      %v1369 = vsel %vm1368, %v1361, %v1365
      %v1370 = vand.u32 2147483647, %v1255
      %vm1371 = vcmp.eq.f32.partialorder %v1370, 8.507059e+37
      %v1372 = vand.u32 %v1255, 2147483648
      %v1373 = vor.u32 1.1754944e-38, %v1372
      %v1374 = vsel %vm1371, %v1373, %v1369
      %v1375 = vmul.f32 1.0, %v1374
      %1384 = vrot.lane.b32.xlu0 %v1270, 120
      %v1385 = vpop.permute.xlu0 %1384
      %1386 = vrot.lane.b32.xlu0 %v1285, 120
      %v1387 = vpop.permute.xlu0 %1386
      %1388 = vrot.lane.b32.xlu0 %v1300, 120
      %v1389 = vpop.permute.xlu0 %1388
      %1390 = vrot.lane.b32.xlu0 %v1315, 120
      %v1391 = vpop.permute.xlu0 %1390
      %1392 = vrot.lane.b32.xlu0 %v1330, 120
      %v1393 = vpop.permute.xlu0 %1392
      %1394 = vrot.lane.b32.xlu0 %v1345, 120
      %v1395 = vpop.permute.xlu0 %1394
      %1396 = vrot.lane.b32.xlu0 %v1360, 120
      %v1397 = vpop.permute.xlu0 %1396
      %1398 = vrot.lane.b32.xlu0 %v1375, 120
      %v1399 = vpop.permute.xlu0 %1398
      %v1408 = vmul.f32 %v1216, %v1385
      %v1409 = vmul.f32 %v1217, %v1387
      %v1410 = vmul.f32 %v1218, %v1389
      %v1411 = vmul.f32 %v1219, %v1391
      %v1412 = vmul.f32 %v1220, %v1393
      %v1413 = vmul.f32 %v1221, %v1395
      %v1414 = vmul.f32 %v1222, %v1397
      %v1415 = vmul.f32 %v1223, %v1399
      %1416 = vst.msk [vmem:[%s224] sm:$0xff] %vm706, %v1408
      %1417 = vst.msk [vmem:[%s224 + $0x8] sm:$0xff] %vm706, %v1409
      %1418 = vst.msk [vmem:[%s224 + $0x10] sm:$0xff] %vm706, %v1410
      %1419 = vst.msk [vmem:[%s224 + $0x18] sm:$0xff] %vm706, %v1411
      %1420 = vst.msk [vmem:[%s224 + $0x20] sm:$0xff] %vm706, %v1412
      %1421 = vst.msk [vmem:[%s224 + $0x28] sm:$0xff] %vm706, %v1413
      %1422 = vst.msk [vmem:[%s224 + $0x30] sm:$0xff] %vm706, %v1414
      %1423 = vst.msk [vmem:[%s224 + $0x38] sm:$0xff] %vm706, %v1415
      %p1424 = scmp.lt.s32.totalorder %s16, 1
      %s1425 = scalar_select %p1424, %s16, 1
      %s1426 = smul.addr %s1425, 8
      %s1427 = smul.addr %s1426, 8
      %s1428 = scalar_lea.vmem %s5, %s1427
      // Predicated region
      $region41: #{g_downsampling_block.1} parent=39 // pred_check
        %p1429 = pneg %p144
      $region42: #{g_downsampling_block.1} parent=39 // pred_check_branch
        %1431 = sbr.rel (%p1429) target = $region44
      $region43: #{g_downsampling_block.1} parent=39 // pred_region
        _
      $region44: #{g_downsampling_block.1} parent=39 // pred_fallthru
        _
    $region40: #{g_downsampling_block.1} parent=5 // pred_fallthru
      _
    %p1432 = scmp.le.s32.totalorder 2, %s11
    // Predicated region
    $region45: #{g_downsampling_block.1} parent=5 // pred_check
      %p1433 = pneg %p1432
    $region46: #{g_downsampling_block.1} parent=5 // pred_check_branch
      %1435 = sbr.rel (%p1433) target = $region48
    $region47: #{g_downsampling_block.1} parent=5 // pred_region
      %s1436 = ssub.s32 %s11, 2
      // Predicated region
      $region49: #{g_downsampling_block.1} parent=47 // pred_check
        %p1437 = pneg %p150
      $region50: #{g_downsampling_block.1} parent=47 // pred_check_branch
        %1439 = sbr.rel (%p1437) target = $region52
      $region51: #{g_downsampling_block.1} parent=47 // pred_region
        %p1440 = scmp.lt.s32.totalorder %s17, 1
        %s1441 = scalar_select %p1440, %s17, 1
        %s1442 = smul.addr %s1441, 8
        %s1443 = smul.addr %s1442, 8
        %s1444 = scalar_lea.vmem %s5, %s1443
      $region52: #{g_downsampling_block.1} parent=47 // pred_fallthru
        _
    $region48: #{g_downsampling_block.1} parent=5 // pred_fallthru
      _
  $region6: #{g_downsampling_block.1} parent=0 // loop_footer
    %s15 = sadd.s32 1, %s11
  $region7: #{g_downsampling_block.1} parent=0 // loop_footer_branch
    %10 = sbr.rel target = $region3
  $region8: #{g_downsampling_block.1} parent=0 // loop_exit
    _

</llo_original>
